<compile_context>
chip_gen: v7x
topology: tpu7x:2x2x1
jax: 0.10.0
libtpu: 0.0.40
codegen_flags: <defaults>
</compile_context>

<pallas_src>
import functools

import numpy as np
import jax
import jax.numpy as jnp
from jax import lax
from jax.experimental import pallas as pl
from jax.experimental.pallas import tpu as pltpu

_LANE = 128
_SUB = 8


def _round_up(x, m):
    return ((x + m - 1) // m) * m


def _deform_dense_kernel(off_ref, prow_ref, rest_ref, delta_ref, pvals_ref, out_ref,
                         *, blk_rows):
    # Hot path: lane-dense elementwise add -> full-vreg VPU op, unmasked stores,
    # full-rate HBM streaming on every generation.
    out_ref[...] = (rest_ref[...] + delta_ref[...]).astype(out_ref.dtype)

    # Handle scatter: visit only the patch rows owned by this tile
    # ([off[i], off[i+1]) precomputed host-side), overwriting each with a
    # prebuilt 128-lane patch row.  O(#handles) total, aligned (1, 128) stores.
    i = pl.program_id(0)
    tile_row0 = i * blk_rows

    def overwrite(j, carry):
        local = prow_ref[j] - tile_row0          # scalar math from SMEM
        out_ref[pl.ds(local, 1), :] = pvals_ref[pl.ds(j, 1), :]
        return carry

    lax.fori_loop(off_ref[i], off_ref[i + 1], overwrite, 0)


def deform_state_forward(rest_pts, delta_pts, handle_idx, handle_pts, *,
                         block_rows=2048):
    """Pallas implementation of DeformState.forward.

    handle_idx must be a host-side (numpy) integer array, mirroring the PyTorch
    signature `handle_idx: np.ndarray`; it is used at trace time to build the
    scatter schedule (per-tile ranges, duplicate resolution, negative wrap).
    """
    N = int(rest_pts.shape[0])
    out_dtype = jnp.result_type(rest_pts.dtype, delta_pts.dtype)

    # ---- lane-dense view: flat f32[3N], padded to a multiple of 8*128 ----
    flat_len = 3 * N
    rows = max(1, -(-flat_len // _LANE))                    # ceil(3N / 128)
    block_rows = max(_SUB, (int(block_rows) // _SUB) * _SUB)
    if rows <= block_rows:
        blk = _round_up(rows, _SUB)                         # single full block
        padded_rows = blk
    else:
        blk = block_rows
        padded_rows = _round_up(rows, blk)                  # exact division -> no boundary masking
    num_tiles = padded_rows // blk
    padded_len = padded_rows * _LANE
    pad = padded_len - flat_len

    rest_flat = jnp.reshape(rest_pts, (flat_len,))
    delta_flat = jnp.reshape(delta_pts, (flat_len,))
    if pad:
        rest_flat = jnp.pad(rest_flat, (0, pad))
        delta_flat = jnp.pad(delta_flat, (0, pad))
    rest2d = rest_flat.reshape(padded_rows, _LANE)
    delta2d = delta_flat.reshape(padded_rows, _LANE)

    # ---- host-side scatter schedule (handle_idx is static numpy) ----
    hidx_np = np.asarray(handle_idx).reshape(-1).astype(np.int64)
    Nh = int(hidx_np.shape[0])
    if Nh:
        wrapped = np.where(hidx_np < 0, hidx_np + N, hidx_np)   # PyTorch-style negative indexing
        if (wrapped < 0).any() or (wrapped >= N).any():
            raise IndexError(f"handle_idx out of range for num_pts={N}")
        # Duplicate point indices: keep the LAST occurrence (PyTorch index assignment).
        uniq_idx, pos_in_rev = np.unique(wrapped[::-1], return_index=True)
        src_pos = (Nh - 1) - pos_in_rev
    else:
        uniq_idx = np.zeros((0,), np.int64)
        src_pos = np.zeros((0,), np.int64)

    U = int(uniq_idx.shape[0])
    flat_pos = (3 * uniq_idx[:, None] + np.arange(3)[None, :]).reshape(-1)   # (3U,)
    src_row = np.repeat(src_pos, 3)
    src_col = np.tile(np.arange(3), U)
    dense_row = flat_pos // _LANE
    dense_col = flat_pos % _LANE
    patch_rows_np = np.unique(dense_row)                    # sorted affected 128-lane rows
    P = int(patch_rows_np.shape[0])
    slot = np.searchsorted(patch_rows_np, dense_row)
    P_pad = max(_SUB, _round_up(max(P, 1), _SUB))

    # Per-tile half-open ranges over the sorted patch rows.
    offsets_np = np.searchsorted(
        patch_rows_np, np.arange(num_tiles + 1) * blk).astype(np.int32)
    patch_rows_pad = np.zeros((P_pad,), np.int32)
    patch_rows_pad[:P] = patch_rows_np.astype(np.int32)

    # Prebuild full 128-lane patch rows: base = rest+delta for those rows (bit-exact
    # with the in-kernel add), with handle values (cast to out_dtype, matching
    # PyTorch's in-place cast) written into their static lane positions.
    if P:
        base = (rest2d[patch_rows_np, :] + delta2d[patch_rows_np, :]).astype(out_dtype)
        hvals = jnp.asarray(handle_pts).astype(out_dtype)[src_row, src_col]
        patch_vals = base.at[slot, dense_col].set(hvals)
        if P_pad > P:
            patch_vals = jnp.concatenate(
                [patch_vals, jnp.zeros((P_pad - P, _LANE), out_dtype)], axis=0)
    else:
        patch_vals = jnp.zeros((P_pad, _LANE), out_dtype)

    offsets = jnp.asarray(offsets_np)
    patch_rows = jnp.asarray(patch_rows_pad)

    kernel = functools.partial(_deform_dense_kernel, blk_rows=blk)

    grid_spec = pltpu.PrefetchScalarGridSpec(
        num_scalar_prefetch=2,                              # offsets, patch_rows -> SMEM
        grid=(num_tiles,),
        in_specs=[
            pl.BlockSpec((blk, _LANE), lambda i, off, prow: (i, 0)),    # rest (dense)
            pl.BlockSpec((blk, _LANE), lambda i, off, prow: (i, 0)),    # delta (dense)
            pl.BlockSpec((P_pad, _LANE), lambda i, off, prow: (0, 0)),  # patch rows (resident)
        ],
        out_specs=pl.BlockSpec((blk, _LANE), lambda i, off, prow: (i, 0)),
    )

    out2d = pl.pallas_call(
        kernel,
        out_shape=jax.ShapeDtypeStruct((padded_rows, _LANE), out_dtype),
        grid_spec=grid_spec,
        compiler_params=pltpu.CompilerParams(
            dimension_semantics=("parallel",),              # shard tiles across TCs on v7x
            vmem_limit_bytes=32 * 1024 * 1024,              # explicit budget, fits all gens
        ),
    )(offsets, patch_rows, rest2d, delta2d, patch_vals)

    curr_flat = out2d.reshape(padded_len)
    if pad:
        curr_flat = curr_flat[:flat_len]
    return curr_flat.reshape(N, 3)


class DeformState:
    """JAX/Pallas port of the PyTorch DeformState module (forward pass)."""

    def __init__(self, num_pts, corotate=False):
        self.num_pts = num_pts
        # Matches nn.Parameter(torch.zeros(num_pts, 3)) deterministic init.
        self.delta_pts = jnp.zeros((num_pts, 3), jnp.float32)
        self.corotate = corotate
        # TODO(synk): corotate so3 parameter (pp.randn_so3) is unused in forward; not ported.

    def forward(self, rest_pts_tsr, handle_idx, handle_pts_tsr):
        return deform_state_forward(rest_pts_tsr, self.delta_pts,
                                    handle_idx, handle_pts_tsr)


if __name__ == "__main__":
    key = jax.random.PRNGKey(0)
    N, Nh = 1000, 10
    k1, k2, k3 = jax.random.split(key, 3)

    rest_pts = jax.random.normal(k1, (N, 3), dtype=jnp.float32)
    handle_pts = jax.random.normal(k2, (Nh, 3), dtype=jnp.float32)
    delta_pts = 0.1 * jax.random.normal(k3, (N, 3), dtype=jnp.float32)

    # Exercise: rows spanning two 128-lane rows (42), a tile boundary crossing
    # (341 with block_rows=8), a duplicate index (437) and a negative index (-1,
    # duplicating 999) -> last write wins, matching PyTorch.
    handle_idx = np.array([0, 5, 42, 341, 437, 438, 640, 999, -1, 437], dtype=np.int64)

    # Multi-tile call (small explicit block to exercise grid + scatter routing + padding).
    out = deform_state_forward(rest_pts, delta_pts, handle_idx, handle_pts,
                               block_rows=8)
    out = jax.block_until_ready(out)

    # Reference with PyTorch sequential assignment semantics (last write wins).
    ref = np.asarray(rest_pts) + np.asarray(delta_pts)
    hp = np.asarray(handle_pts)
    for j, idx in enumerate(handle_idx):
        ref[idx] = hp[j]

    assert out.shape == (N, 3) and out.dtype == jnp.float32
    assert np.allclose(np.asarray(out), ref, atol=1e-6), "Pallas output mismatch vs reference"

    # Module-style call (default block size -> single full block).
    model = DeformState(N, corotate=False)
    model.delta_pts = delta_pts
    out2 = jax.block_until_ready(model.forward(rest_pts, handle_idx, handle_pts))
    assert np.allclose(np.asarray(out2), ref, atol=1e-6), "Pallas output mismatch (module call)"

    print("KERNEL_OK")
</pallas_src>

<mosaic_0001>
module attributes {stable_mosaic.version = 11 : i64} {
  func.func @_deform_dense_kernel(%arg0: i32, %arg1: memref<4xi32, #tpu.memory_space<smem>>, %arg2: memref<8xi32, #tpu.memory_space<smem>>, %arg3: memref<8x128xf32, #tpu.memory_space<vmem>>, %arg4: memref<8x128xf32, #tpu.memory_space<vmem>>, %arg5: memref<8x128xf32, #tpu.memory_space<vmem>>, %arg6: memref<8x128xf32, #tpu.memory_space<vmem>>) attributes {dimension_semantics = [#tpu.dimension_semantics<parallel>], iteration_bounds = array<i64: 3>, scalar_prefetch = 2 : i64, scratch_operands = 0 : i64, tpu.core_type = #tpu.core_type<tc>, window_params = [{transform_indices = @transform_0, window_bounds = array<i64: 8, 128>}, {transform_indices = @transform_1, window_bounds = array<i64: 8, 128>}, {pipeline_mode = #tpu.pipeline_mode<synchronous>, transform_indices = @transform_2, window_bounds = array<i64: 8, 128>}, {transform_indices = @transform_3, window_bounds = array<i64: 8, 128>}]} {
    %c0 = arith.constant 0 : index
    %c0_0 = arith.constant 0 : index
    %0 = vector.load %arg3[%c0, %c0_0] : memref<8x128xf32, #tpu.memory_space<vmem>>, vector<8x128xf32>
    %c0_1 = arith.constant 0 : index
    %c0_2 = arith.constant 0 : index
    %1 = vector.load %arg4[%c0_1, %c0_2] : memref<8x128xf32, #tpu.memory_space<vmem>>, vector<8x128xf32>
    %2 = arith.addf %0, %1 : vector<8x128xf32>
    %c0_3 = arith.constant 0 : index
    %c0_4 = arith.constant 0 : index
    %3 = vector.load %arg6[%c0_3, %c0_4] : memref<8x128xf32, #tpu.memory_space<vmem>>, vector<8x128xf32>
    tpu.vector_store %arg6[%c0_3, %c0_4], %2 {strides = array<i32>} : memref<8x128xf32, #tpu.memory_space<vmem>>, vector<8x128xf32>,
    %c8_i32 = arith.constant 8 : i32
    %4 = arith.muli %arg0, %c8_i32 : i32
    %5 = arith.index_cast %arg0 : i32 to index
    %6 = memref.load %arg1[%5] : memref<4xi32, #tpu.memory_space<smem>>
    %c1_i32 = arith.constant 1 : i32
    %7 = arith.addi %arg0, %c1_i32 : i32
    %8 = arith.index_cast %7 : i32 to index
    %9 = memref.load %arg1[%8] : memref<4xi32, #tpu.memory_space<smem>>
    %c0_i32 = arith.constant 0 : i32
    %10 = arith.subi %9, %6 : i32
    %11 = arith.addi %6, %10 : i32
    %c1_i32_5 = arith.constant 1 : i32
    scf.for %arg7 = %6 to %11 step %c1_i32_5  : i32 {
      %12 = arith.index_cast %arg7 : i32 to index
      %13 = memref.load %arg2[%12] : memref<8xi32, #tpu.memory_space<smem>>
      %14 = arith.subi %13, %4 : i32
      %15 = arith.index_cast %arg7 : i32 to index
      %c0_6 = arith.constant 0 : index
      %16 = vector.load %arg5[%15, %c0_6] : memref<8x128xf32, #tpu.memory_space<vmem>>, vector<1x128xf32>
      %17 = arith.index_cast %14 : i32 to index
      %c0_7 = arith.constant 0 : index
      %18 = vector.load %arg6[%17, %c0_7] : memref<8x128xf32, #tpu.memory_space<vmem>>, vector<1x128xf32>
      tpu.vector_store %arg6[%17, %c0_7], %16 {strides = array<i32>} : memref<8x128xf32, #tpu.memory_space<vmem>>, vector<1x128xf32>,
    }
    return
  }
  func.func @transform_0(%arg0: i32, %arg1: memref<4xi32, #tpu.memory_space<smem>>, %arg2: memref<8xi32, #tpu.memory_space<smem>>) -> (i32, i32) {
    %c0_i32 = arith.constant 0 : i32
    %c0_i32_0 = arith.constant 0 : i32
    return %arg0, %c0_i32 : i32, i32
  }
  func.func @transform_1(%arg0: i32, %arg1: memref<4xi32, #tpu.memory_space<smem>>, %arg2: memref<8xi32, #tpu.memory_space<smem>>) -> (i32, i32) {
    %c0_i32 = arith.constant 0 : i32
    %c0_i32_0 = arith.constant 0 : i32
    return %arg0, %c0_i32 : i32, i32
  }
  func.func @transform_2(%arg0: i32, %arg1: memref<4xi32, #tpu.memory_space<smem>>, %arg2: memref<8xi32, #tpu.memory_space<smem>>) -> (i32, i32) {
    %c0_i32 = arith.constant 0 : i32
    %c0_i32_0 = arith.constant 0 : i32
    %c0_i32_1 = arith.constant 0 : i32
    return %c0_i32, %c0_i32_0 : i32, i32
  }
  func.func @transform_3(%arg0: i32, %arg1: memref<4xi32, #tpu.memory_space<smem>>, %arg2: memref<8xi32, #tpu.memory_space<smem>>) -> (i32, i32) {
    %c0_i32 = arith.constant 0 : i32
    %c0_i32_0 = arith.constant 0 : i32
    return %arg0, %c0_i32 : i32, i32
  }
}

</mosaic_0001>

<llo_original>
// kernel: tpu_custom_call.1
$region0: #{tpu_custom_call.1}
  #allocation0 [shape = 'u32[]', space=smem, size = 0x4, offset = 0x4, fixed_abs, tag = 'smem constant byte address 0x4 - core index']
  #allocation1 [shape = 'u32[144,128]{1,0:T(1,128)}', space=vmem, size = 0x12000, scoped, tag = 'internal scratch']
  #allocation2 [shape = 's32[1]{0}', space=sflag, size = 0x4, scoped, tag = 'scoped memory for tpu_custom_call.1']
  #allocation3 [shape = 'u8[512]{0}', space=smem, size = 0x200, scoped, tag = 'prefetched SMEM operand 0']
  #allocation4 [shape = 'u8[512]{0}', space=smem, size = 0x200, scoped, tag = 'prefetched SMEM operand 1']
  %s0 = inlined_call_operand.hbm [shape: s32[4], index: 0, kind: input, shape index: {}]
  %s1 = inlined_call_operand.vmem [shape: s32[8], index: 1, kind: input, shape index: {}]
  %s2 = inlined_call_operand.hbm [shape: f32[24,128], index: 2, kind: input, shape index: {}]
  %s3 = inlined_call_operand.hbm [shape: f32[24,128], index: 3, kind: input, shape index: {}]
  %s4 = inlined_call_operand.vmem [shape: f32[8,128], index: 4, kind: input, shape index: {}]
  %s5 = inlined_call_operand.hbm [shape: f32[24,128], index: 5, kind: output, shape index: {}]
  %s6 = sld [smem:[#allocation0]]
  $region60: #{tpu_custom_call.1} parent=0
    _
  %s8 = ssub.s32 1, %s6
  %s9 = scalar_select 0, %s8, %s6
  %11 = dma.hbm_to_smem %s0, 16, [#allocation3], [#allocation2]
  %s12 = sshll.u32 %s1, 4
  %s13 = int_to_ptr.vmem [resolvable:$true] %s12
  %15 = dma.vmem_to_smem %s13, 16, [#allocation4], [#allocation2]
  %16 = dma.done [#allocation2], 32
  %17 = sfence
  $region1: #{tpu_custom_call.1} parent=0
    #allocation5 [shape = 'u8[8192]{0}', space=vmem, size = 0x2000, scoped, tag = 'input window, operand 2']
    #allocation6 [shape = 's32[2]{0}', space=sflag, size = 0x8, scoped, tag = 'scoped memory for tpu_custom_call.1']
    #allocation7 [shape = 's32[2]{0}', space=sflag, size = 0x8, scoped, tag = 'scoped memory for tpu_custom_call.1']
    #allocation8 [shape = 'u8[8192]{0}', space=vmem, size = 0x2000, scoped, tag = 'input window, operand 3']
    #allocation9 [shape = 's32[2]{0}', space=sflag, size = 0x8, scoped, tag = 'scoped memory for tpu_custom_call.1']
    #allocation10 [shape = 'u8[8192]{0}', space=vmem, size = 0x2000, scoped, tag = 'output window, operand 0']
    %18 = vsyncpa [#allocation6], 0
    %s19 = scalar_lea.sflag [#allocation6], 1
    %20 = vsyncpa %s19, 0
    %21 = vsyncpa [#allocation9], 0
    %s22 = scalar_lea.sflag [#allocation9], 1
    %23 = vsyncpa %s22, 0
    %24 = vsyncpa [#allocation7], 0
    %s25 = scalar_lea.sflag [#allocation7], 1
    %26 = vsyncpa %s25, 0
    loop: start=0, step=1, limit=5
    $region2: #{tpu_custom_call.1} parent=1 // loop_pre_header
      _
    $region3: #{tpu_custom_call.1} parent=1 // loop_header
      %s28 = sphi 0, %s32
      %p29 = scmp.ge.s32.totalorder %s28, 5
      %s38 = sphi 0, %s40
      %s41 = sphi 0, %s38
      %s42 = sphi 0, %s41
      %s58 = sphi 0, %s42
      %s64 = sphi 0, %s66
      %s67 = sphi 0, %s64
      %s68 = sphi 0, %s67
      %s84 = sphi 0, %s68
      %s88 = sphi 0, %s88
      %s90 = sphi 0, %s88
      %s91 = sphi 0, %s90
      %s105 = sphi 0, %s91
      %s111 = sphi 0, %s113
      %s114 = sphi 0, %s111
      %s115 = sphi 0, %s114
      %s131 = sphi 0, %s115
    $region4: #{tpu_custom_call.1} parent=1 // loop_header_branch
      %31 = sbr.rel (%p29) target = $region8
    $region5: #{tpu_custom_call.1} parent=1 // loop_body
      %s33 = ssub.s32 %s28, 1
      %s34 = ssub.s32 %s28, 2
      %s35 = sadd.s32 %s28, 1
      %s36 = ssub.s32 %s28, %s35
      %p37 = scmp.eq.s32.totalorder %s36, 0
      %s39 = sadd.s32 %s38, 1
      %s40 = scalar_select %p37, %s38, %s39
      %p43 = pneg %p37
      %p44 = scmp.eq.s32.totalorder %s28, 2
      %p45 = por %p43, %p44
      %p46 = scmp.ne.s32.totalorder %s38, %s41
      %p47 = scmp.eq.s32.totalorder %s28, 0
      %p48 = por %p46, %p47
      %p49 = scmp.ne.s32.totalorder %s38, %s41
      %p50 = scmp.eq.s32.totalorder %s33, 2
      %p51 = por %p49, %p50
      %p52 = scmp.ne.s32.totalorder %s41, %s42
      %p53 = scmp.eq.s32.totalorder %s33, 0
      %p54 = por %p52, %p53
      %p55 = scmp.ne.s32.totalorder %s41, %s42
      %p56 = scmp.eq.s32.totalorder %s34, 2
      %p57 = por %p55, %p56
      %p59 = scmp.ne.s32.totalorder %s42, %s58
      %p60 = scmp.eq.s32.totalorder %s34, 0
      %p61 = por %p59, %p60
      %s62 = ssub.s32 %s28, %s35
      %p63 = scmp.eq.s32.totalorder %s62, 0
      %s65 = sadd.s32 %s64, 1
      %s66 = scalar_select %p63, %s64, %s65
      %p69 = pneg %p63
      %p70 = scmp.eq.s32.totalorder %s28, 2
      %p71 = por %p69, %p70
      %p72 = scmp.ne.s32.totalorder %s64, %s67
      %p73 = scmp.eq.s32.totalorder %s28, 0
      %p74 = por %p72, %p73
      %p75 = scmp.ne.s32.totalorder %s64, %s67
      %p76 = scmp.eq.s32.totalorder %s33, 2
      %p77 = por %p75, %p76
      %p78 = scmp.ne.s32.totalorder %s67, %s68
      %p79 = scmp.eq.s32.totalorder %s33, 0
      %p80 = por %p78, %p79
      %p81 = scmp.ne.s32.totalorder %s67, %s68
      %p82 = scmp.eq.s32.totalorder %s34, 2
      %p83 = por %p81, %p82
      %p85 = scmp.ne.s32.totalorder %s68, %s84
      %p86 = scmp.eq.s32.totalorder %s34, 0
      %p87 = por %p85, %p86
      %s89 = sadd.s32 %s88, 1
      %p92 = scmp.eq.s32.totalorder %s28, 2
      %p93 = scmp.ne.s32.totalorder %s88, %s90
      %p94 = scmp.eq.s32.totalorder %s28, 0
      %p95 = por %p93, %p94
      %p96 = scmp.ne.s32.totalorder %s88, %s90
      %p97 = scmp.eq.s32.totalorder %s33, 2
      %p98 = por %p96, %p97
      %p99 = scmp.ne.s32.totalorder %s90, %s91
      %p100 = scmp.eq.s32.totalorder %s33, 0
      %p101 = por %p99, %p100
      %p102 = scmp.ne.s32.totalorder %s90, %s91
      %p103 = scmp.eq.s32.totalorder %s34, 2
      %p104 = por %p102, %p103
      %p106 = scmp.ne.s32.totalorder %s91, %s105
      %p107 = scmp.eq.s32.totalorder %s34, 0
      %p108 = por %p106, %p107
      %s109 = ssub.s32 %s28, %s35
      %p110 = scmp.eq.s32.totalorder %s109, 0
      %s112 = sadd.s32 %s111, 1
      %s113 = scalar_select %p110, %s111, %s112
      %p116 = pneg %p110
      %p117 = scmp.eq.s32.totalorder %s28, 2
      %p118 = por %p116, %p117
      %p119 = scmp.ne.s32.totalorder %s111, %s114
      %p120 = scmp.eq.s32.totalorder %s28, 0
      %p121 = por %p119, %p120
      %p122 = scmp.ne.s32.totalorder %s111, %s114
      %p123 = scmp.eq.s32.totalorder %s33, 2
      %p124 = por %p122, %p123
      %p125 = scmp.ne.s32.totalorder %s114, %s115
      %p126 = scmp.eq.s32.totalorder %s33, 0
      %p127 = por %p125, %p126
      %p128 = scmp.ne.s32.totalorder %s114, %s115
      %p129 = scmp.eq.s32.totalorder %s34, 2
      %p130 = por %p128, %p129
      %p132 = scmp.ne.s32.totalorder %s115, %s131
      %p133 = scmp.eq.s32.totalorder %s34, 0
      %p134 = por %p132, %p133
      %p135 = scmp.le.s32.totalorder 1, %s28
      %p136 = scmp.lt.s32.totalorder %s28, 4
      %p137 = pnand %p135, %p136
      %p138 = pneg %p137
      // Predicated region
      $region9: #{tpu_custom_call.1} parent=5 // pred_check
        _
      $region10: #{tpu_custom_call.1} parent=5 // pred_check_branch
        %140 = sbr.rel (%p137) target = $region12
      $region11: #{tpu_custom_call.1} parent=5 // pred_region
        %s141 = ssub.s32 %s28, 1
        // Predicated region
        $region13: #{tpu_custom_call.1} parent=11 // pred_check
          %p142 = pneg %p101
        $region14: #{tpu_custom_call.1} parent=11 // pred_check_branch
          %144 = sbr.rel (%p142) target = $region16
        $region15: #{tpu_custom_call.1} parent=11 // pred_region
          _
        $region16: #{tpu_custom_call.1} parent=11 // pred_fallthru
          _
      $region12: #{tpu_custom_call.1} parent=5 // pred_fallthru
        _
      %p145 = scmp.lt.s32.totalorder %s28, 3
      // Predicated region
      $region17: #{tpu_custom_call.1} parent=5 // pred_check
        %p146 = pneg %p145
      $region18: #{tpu_custom_call.1} parent=5 // pred_check_branch
        %148 = sbr.rel (%p146) target = $region20
      $region19: #{tpu_custom_call.1} parent=5 // pred_region
        // Predicated region
        $region21: #{tpu_custom_call.1} parent=19 // pred_check
          %p149 = pneg %p48
        $region22: #{tpu_custom_call.1} parent=19 // pred_check_branch
          %151 = sbr.rel (%p149) target = $region24
        $region23: #{tpu_custom_call.1} parent=19 // pred_region
          %s152 = sand.u32 %s38, 1
          %s153 = scalar_lea.sflag [#allocation6], %s152
          %s154 = sand.u32 %s38, 1
          %s155 = smul.addr %s154, 8
          %s156 = scalar_lea.vmem [#allocation5], %s155
          %s158 = ssub.s32 128, 128
          %159 = vsyncadd %s153, %s158
          %s160 = smul.addr %s28, 128
          %s161 = scalar_lea.hbm %s2, %s160
          %s163 = sshll.u32 %s156, 4
          %s164 = int_to_ptr.vmem [resolvable:$true] %s163
          %166 = dma.hbm_to_vmem [thread:$0]  %s161, 128, %s164, %s153
        $region24: #{tpu_custom_call.1} parent=19 // pred_fallthru
          _
        // Predicated region
        $region25: #{tpu_custom_call.1} parent=19 // pred_check
          %p167 = pneg %p74
        $region26: #{tpu_custom_call.1} parent=19 // pred_check_branch
          %169 = sbr.rel (%p167) target = $region28
        $region27: #{tpu_custom_call.1} parent=19 // pred_region
          %s170 = sand.u32 %s64, 1
          %s171 = scalar_lea.sflag [#allocation9], %s170
          %s172 = sand.u32 %s64, 1
          %s173 = smul.addr %s172, 8
          %s174 = scalar_lea.vmem [#allocation8], %s173
          %s176 = ssub.s32 128, 128
          %177 = vsyncadd %s171, %s176
          %s178 = smul.addr %s28, 128
          %s179 = scalar_lea.hbm %s3, %s178
          %s181 = sshll.u32 %s174, 4
          %s182 = int_to_ptr.vmem [resolvable:$true] %s181
          %184 = dma.hbm_to_vmem [thread:$0]  %s179, 128, %s182, %s171
        $region28: #{tpu_custom_call.1} parent=19 // pred_fallthru
          _
      $region20: #{tpu_custom_call.1} parent=5 // pred_fallthru
        _
      %p185 = scmp.le.s32.totalorder 1, %s28
      %p186 = scmp.lt.s32.totalorder %s28, 4
      %p187 = pnand %p185, %p186
      %p188 = pneg %p187
      // Predicated region
      $region29: #{tpu_custom_call.1} parent=5 // pred_check
        _
      $region30: #{tpu_custom_call.1} parent=5 // pred_check_branch
        %190 = sbr.rel (%p187) target = $region32
      $region31: #{tpu_custom_call.1} parent=5 // pred_region
        %s191 = ssub.s32 %s28, 1
        %s192 = sand.u32 %s41, 1
        %s193 = scalar_lea.sflag [#allocation6], %s192
        %s194 = sand.u32 %s41, 1
        %s195 = smul.addr %s194, 8
        %s196 = scalar_lea.vmem [#allocation5], %s195
        // Predicated region
        $region33: #{tpu_custom_call.1} parent=31 // pred_check
          %p197 = pneg %p54
        $region34: #{tpu_custom_call.1} parent=31 // pred_check_branch
          %199 = sbr.rel (%p197) target = $region36
        $region35: #{tpu_custom_call.1} parent=31 // pred_region
          %200 = dma.done %s193, 128
        $region36: #{tpu_custom_call.1} parent=31 // pred_fallthru
          _
        %s201 = sand.u32 %s67, 1
        %s202 = scalar_lea.sflag [#allocation9], %s201
        %s203 = sand.u32 %s67, 1
        %s204 = smul.addr %s203, 8
        %s205 = scalar_lea.vmem [#allocation8], %s204
        // Predicated region
        $region37: #{tpu_custom_call.1} parent=31 // pred_check
          %p206 = pneg %p80
        $region38: #{tpu_custom_call.1} parent=31 // pred_check_branch
          %208 = sbr.rel (%p206) target = $region40
        $region39: #{tpu_custom_call.1} parent=31 // pred_region
          %209 = dma.done %s202, 128
        $region40: #{tpu_custom_call.1} parent=31 // pred_fallthru
          _
        %s210 = sand.u32 %s41, 1
        %s211 = scalar_lea.sflag [#allocation6], %s210
        %s212 = sand.u32 %s41, 1
        %s213 = smul.addr %s212, 8
        %s214 = scalar_lea.vmem [#allocation5], %s213
        %p215 = pneg %p54
        %p216 = pneg %p51
        %s217 = sand.u32 %s67, 1
        %s218 = scalar_lea.sflag [#allocation9], %s217
        %s219 = sand.u32 %s67, 1
        %s220 = smul.addr %s219, 8
        %s221 = scalar_lea.vmem [#allocation8], %s220
        %p222 = pneg %p80
        %p223 = pneg %p77
        %p224 = pneg %p101
        %p225 = pneg %p98
        %p226 = pneg %p127
        %p227 = pneg %p124
        %s228 = sand.u32 %s114, 1
        %s229 = scalar_lea.sflag [#allocation7], %s228
        %s230 = sand.u32 %s114, 1
        %s231 = smul.addr %s230, 8
        %s232 = scalar_lea.vmem [#allocation10], %s231
        %v233 = vld [vmem:[%s196] sm:$0xff]
        %v234 = vld [vmem:[%s205] sm:$0xff]
        %v235 = vadd.f32 %v233, %v234
        %236 = vst [vmem:[%s232] sm:$0xff] %v235
        %s237 = smul.u32 %s33, 8
        %s238 = sld [smem:[#allocation3 + %s33]]
        %s239 = sadd.s32 %s33, 1
        %s240 = sld [smem:[#allocation3 + %s239]]
        // While loop
        $region41: #{tpu_custom_call.1} parent=31 // loop_pre_header
          _
        $region42: #{tpu_custom_call.1} parent=31 // loop_header
          %s242 = sphi %s238, %s244
          %p243 = scmp.ge.s32.totalorder %s242, %s240
        $region43: #{tpu_custom_call.1} parent=31 // loop_header_branch
          %246 = sbr.rel (%p243) target = $region47
        $region44: #{tpu_custom_call.1} parent=31 // loop_body
          %s247 = sld [smem:[#allocation4 + %s242]]
          %s248 = ssub.s32 %s247, %s237
          %s249 = scalar_lea.vmem %s4, %s242
          %v250 = vld [vmem:[%s249] sm:$0x1]
          %s251 = scalar_lea.vmem %s232, %s248 [#allocation10]
          %252 = vst [vmem:[%s251] sm:$0x1] %v250
        $region45: #{tpu_custom_call.1} parent=31 // loop_footer
          %s244 = sadd.s32 %s242, 1
        $region46: #{tpu_custom_call.1} parent=31 // loop_footer_branch
          %241 = sbr.rel target = $region42
        $region47: #{tpu_custom_call.1} parent=31 // loop_exit
          _
        %s253 = sand.u32 %s114, 1
        %s254 = scalar_lea.sflag [#allocation7], %s253
        %s255 = sand.u32 %s114, 1
        %s256 = smul.addr %s255, 8
        %s257 = scalar_lea.vmem [#allocation10], %s256
        // Predicated region
        $region48: #{tpu_custom_call.1} parent=31 // pred_check
          %p258 = pneg %p124
        $region49: #{tpu_custom_call.1} parent=31 // pred_check_branch
          %260 = sbr.rel (%p258) target = $region51
        $region50: #{tpu_custom_call.1} parent=31 // pred_region
          %s262 = ssub.s32 128, 128
          %263 = vsyncadd %s254, %s262
          %s264 = smul.addr %s33, 128
          %s265 = scalar_lea.hbm %s5, %s264
          %s267 = sshll.u32 %s257, 4
          %s268 = int_to_ptr.vmem [resolvable:$true] %s267
          %270 = dma.vmem_to_hbm [thread:$0]  %s268, 128, %s265, %s254
        $region51: #{tpu_custom_call.1} parent=31 // pred_fallthru
          _
      $region32: #{tpu_custom_call.1} parent=5 // pred_fallthru
        _
      %p271 = scmp.le.s32.totalorder 2, %s28
      // Predicated region
      $region52: #{tpu_custom_call.1} parent=5 // pred_check
        %p272 = pneg %p271
      $region53: #{tpu_custom_call.1} parent=5 // pred_check_branch
        %274 = sbr.rel (%p272) target = $region55
      $region54: #{tpu_custom_call.1} parent=5 // pred_region
        %s275 = ssub.s32 %s28, 2
        // Predicated region
        $region56: #{tpu_custom_call.1} parent=54 // pred_check
          %p276 = pneg %p130
        $region57: #{tpu_custom_call.1} parent=54 // pred_check_branch
          %278 = sbr.rel (%p276) target = $region59
        $region58: #{tpu_custom_call.1} parent=54 // pred_region
          %s279 = sand.u32 %s115, 1
          %s280 = scalar_lea.sflag [#allocation7], %s279
          %s281 = sand.u32 %s115, 1
          %s282 = smul.addr %s281, 8
          %s283 = scalar_lea.vmem [#allocation10], %s282
          %284 = dma.done %s280, 128
        $region59: #{tpu_custom_call.1} parent=54 // pred_fallthru
          _
      $region55: #{tpu_custom_call.1} parent=5 // pred_fallthru
        _
    $region6: #{tpu_custom_call.1} parent=1 // loop_footer
      %s32 = sadd.s32 1, %s28
    $region7: #{tpu_custom_call.1} parent=1 // loop_footer_branch
      %27 = sbr.rel target = $region3
    $region8: #{tpu_custom_call.1} parent=1 // loop_exit
      _
    %285 = vsyncpa [#allocation6], 1
    %s286 = scalar_lea.sflag [#allocation6], 1
    %287 = vsyncpa %s286, 1
    %288 = vsyncpa [#allocation9], 1
    %s289 = scalar_lea.sflag [#allocation9], 1
    %290 = vsyncpa %s289, 1
    %291 = vsyncpa [#allocation7], 1
    %s292 = scalar_lea.sflag [#allocation7], 1
    %293 = vsyncpa %s292, 1

</llo_original>
